<compile_context>
chip_gen: v7x
topology: tpu7x:2x2x1
jax: 0.10.0
libtpu: 0.0.40
codegen_flags: <defaults>
</compile_context>

<pallas_src>
import jax
import jax.numpy as jnp
from jax.experimental import pallas as pl
from jax.experimental.pallas import tpu as pltpu

# ---- synthetic model config (small, consistent with the forward pass) ----
VOCAB = 64            # synthetic vocab
HIDDEN = 32           # VLM hidden size (stand-in)
EMB_DIM = 128         # ColPali embedding dim (real model uses 128)
SEQ = 32              # sequence length of input_ids / attention_mask
IMG_C, IMG_H, IMG_W = 3, 32, 32
PATCH = 8
N_PATCH = (IMG_H // PATCH) * (IMG_W // PATCH)    # 16 image tokens (sublane-aligned)
PATCH_K = IMG_C * PATCH * PATCH                  # 192
BATCH_BLOCK = 8       # sequences per grid step -> 8*32 = 256 flattened rows per step
EPS = 1e-12           # guards rsqrt against an exactly-zero projection row (NaN hazard)
OUT_DTYPE = jnp.bfloat16   # HBM writeback dtype; use jnp.float32 if downstream needs it


# ---------------- Pallas kernels ----------------

def _project_norm_mask(h2d, wproj, m3d, out3d_shape):
    """(rows, HIDDEN) bf16 -> projected, L2-normalized, masked (bb, rows/bb, EMB) f32."""
    proj = jnp.dot(h2d, wproj, preferred_element_type=jnp.float32)
    proj = proj.reshape(out3d_shape)                       # (bb, r, EMB_DIM) f32
    sumsq = jnp.sum(proj * proj, axis=-1, keepdims=True)
    # rsqrt runs on the EUP slot; fold the attention mask into the (bb, r, 1) scale so the
    # only full-width VPU op is the final multiply.
    scale = jax.lax.rsqrt(jnp.maximum(sumsq, EPS)) * m3d
    return proj * scale


def _head_kernel(h_ref, m_ref, wproj_ref, o_ref):
    # text-only path. h (bb, SEQ, HIDDEN) bf16, m (bb, SEQ, 1) f32, o (bb, SEQ, EMB) bf16
    bb, s, hdim = h_ref.shape
    emb = _project_norm_mask(h_ref[...].reshape(bb * s, hdim),
                             wproj_ref[...], m_ref[...], (bb, s, EMB_DIM))
    o_ref[...] = emb.astype(o_ref.dtype)


def _fused_mm_kernel(h_ref, p_ref, m_ref, wpatch_ref, wproj_ref, o_ref):
    # multimodal path: patch projection + injection at the first N_PATCH positions +
    # retrieval head, all in one grid step. Patches are UNPADDED: only real image rows
    # hit HBM and the MXU; injection is expressed as two aligned output-slice stores.
    bb, s, hdim = h_ref.shape
    npatch = p_ref.shape[1]

    # --- image-token rows: SigLIP-style patch projection then retrieval head ---
    p2 = p_ref[...].reshape(bb * npatch, p_ref.shape[2])              # (bb*NP, PATCH_K) bf16
    img = jnp.dot(p2, wpatch_ref[...], preferred_element_type=jnp.float32)
    img = img.astype(jnp.bfloat16)                                    # bf16 MXU operand
    emb_img = _project_norm_mask(img, wproj_ref[...],
                                 m_ref[:, :npatch, :], (bb, npatch, EMB_DIM))
    o_ref[:, :npatch, :] = emb_img.astype(o_ref.dtype)

    # --- text-token rows (positions >= N_PATCH keep the language-model hidden state) ---
    h_txt = h_ref[:, npatch:, :].reshape(bb * (s - npatch), hdim)     # (bb*(S-NP), H) bf16
    emb_txt = _project_norm_mask(h_txt, wproj_ref[...],
                                 m_ref[:, npatch:, :], (bb, s - npatch, EMB_DIM))
    o_ref[:, npatch:, :] = emb_txt.astype(o_ref.dtype)


# ---------------- Pallas wrapper (mirrors ColPaliWrapper.forward) ----------------

def init_params(key):
    k0, k1, k2 = jax.random.split(key, 3)
    return {
        "embed_table": jax.random.normal(k0, (VOCAB, HIDDEN), jnp.float32) * 0.02,
        "w_patch": jax.random.normal(k1, (PATCH_K, HIDDEN), jnp.float32) * 0.02,
        "w_proj": jax.random.normal(k2, (HIDDEN, EMB_DIM), jnp.float32) * 0.02,
    }


def colpali_forward(params, input_ids, attention_mask, pixel_values=None):
    B, S = input_ids.shape
    assert S == SEQ
    bb = min(BATCH_BLOCK, B)
    assert B % bb == 0, "batch must tile evenly into BATCH_BLOCK-sized blocks"

    # token "hidden states" (stand-in for the VLM last_hidden_state) -- glue gather.
    # bf16 at the pallas_call boundary (MXU operand); f32 accumulation in-kernel.
    hidden = params["embed_table"][input_ids].astype(jnp.bfloat16)     # (B, S, HIDDEN)
    mask = attention_mask.astype(jnp.float32)[..., None]               # (B, S, 1)
    w_proj = params["w_proj"].astype(jnp.bfloat16)

    grid = (B // bb,)   # >= 2 independent blocks keeps both v7x TensorCores busy
    cparams = pltpu.CompilerParams(dimension_semantics=("parallel",),
                                   vmem_limit_bytes=32 * 1024 * 1024)
    out_shape = jax.ShapeDtypeStruct((B, S, EMB_DIM), OUT_DTYPE)

    row_spec = lambda last: pl.BlockSpec((bb, S, last), lambda i: (i, 0, 0))
    const_spec = lambda shp: pl.BlockSpec(shp, lambda i: (0, 0))   # VMEM-resident weights

    if pixel_values is None:
        return pl.pallas_call(
            _head_kernel,
            out_shape=out_shape,
            grid=grid,
            in_specs=[row_spec(HIDDEN),
                      row_spec(1),
                      const_spec((HIDDEN, EMB_DIM))],
            out_specs=row_spec(EMB_DIM),
            compiler_params=cparams,
        )(hidden, mask, w_proj)

    # NCHW -> (B, N_PATCH, C*ph*pw) patchify (glue). No zero-padding: the kernel only
    # touches real image rows.
    p = pixel_values.reshape(B, IMG_C, IMG_H // PATCH, PATCH, IMG_W // PATCH, PATCH)
    patches = p.transpose(0, 2, 4, 1, 3, 5).reshape(B, N_PATCH, PATCH_K).astype(jnp.bfloat16)
    w_patch = params["w_patch"].astype(jnp.bfloat16)

    return pl.pallas_call(
        _fused_mm_kernel,
        out_shape=out_shape,
        grid=grid,
        in_specs=[row_spec(HIDDEN),
                  pl.BlockSpec((bb, N_PATCH, PATCH_K), lambda i: (i, 0, 0)),
                  row_spec(1),
                  const_spec((PATCH_K, HIDDEN)),
                  const_spec((HIDDEN, EMB_DIM))],
        out_specs=row_spec(EMB_DIM),
        compiler_params=cparams,
    )(hidden, patches, mask, w_patch, w_proj)


# ---------------- pure-JAX reference (f32) for correctness checking ----------------

def colpali_reference(params, input_ids, attention_mask, pixel_values=None):
    hidden = params["embed_table"][input_ids]
    if pixel_values is not None:
        B = pixel_values.shape[0]
        p = pixel_values.reshape(B, IMG_C, IMG_H // PATCH, PATCH, IMG_W // PATCH, PATCH)
        p = p.transpose(0, 2, 4, 1, 3, 5).reshape(B, N_PATCH, PATCH_K)
        img = jnp.einsum("bpk,kh->bph", p, params["w_patch"])
        hidden = hidden.at[:, :N_PATCH, :].set(img)
    proj = jnp.einsum("bsh,he->bse", hidden, params["w_proj"])
    proj = proj / jnp.linalg.norm(proj, axis=-1, keepdims=True)
    return proj * attention_mask.astype(jnp.float32)[..., None]


if __name__ == "__main__":
    key = jax.random.PRNGKey(0)
    k_params, k_ids, k_pix = jax.random.split(key, 3)
    params = init_params(k_params)

    B = 16
    input_ids = jax.random.randint(k_ids, (B, SEQ), 0, VOCAB, dtype=jnp.int32)
    attention_mask = jnp.ones((B, SEQ), jnp.int32)
    attention_mask = attention_mask.at[1, SEQ - 3:].set(0)       # pad tail of batch 1
    attention_mask = attention_mask.at[B - 1, SEQ - 6:].set(0)   # pad tail of last batch
    pixel_values = jax.random.normal(k_pix, (B, IMG_C, IMG_H, IMG_W), jnp.float32)

    # text-only path (pixel_values is None)
    emb_text = colpali_forward(params, input_ids, attention_mask, None)
    # multimodal path
    emb_mm = colpali_forward(params, input_ids, attention_mask, pixel_values)
    jax.block_until_ready((emb_text, emb_mm))

    assert emb_text.shape == (B, SEQ, EMB_DIM)
    assert emb_mm.shape == (B, SEQ, EMB_DIM)

    # loose tolerance: bf16 MXU operands + bf16 writeback, f32 accumulation/epilogue
    ref_text = colpali_reference(params, input_ids, attention_mask, None)
    ref_mm = colpali_reference(params, input_ids, attention_mask, pixel_values)
    err_text = float(jnp.max(jnp.abs(emb_text.astype(jnp.float32) - ref_text)))
    err_mm = float(jnp.max(jnp.abs(emb_mm.astype(jnp.float32) - ref_mm)))
    assert err_text < 5e-2, err_text
    assert err_mm < 5e-2, err_mm

    print("KERNEL_OK")
</pallas_src>

<mosaic_0001>
module attributes {stable_mosaic.version = 11 : i64} {
  func.func @_head_kernel(%arg0: i32, %arg1: memref<8x32x32xbf16, #tpu.memory_space<vmem>>, %arg2: memref<8x32x1xf32, #tpu.memory_space<vmem>>, %arg3: memref<32x128xbf16, #tpu.memory_space<vmem>>, %arg4: memref<8x32x128xbf16, #tpu.memory_space<vmem>>) attributes {dimension_semantics = [#tpu.dimension_semantics<parallel>], iteration_bounds = array<i64: 2>, scalar_prefetch = 0 : i64, scratch_operands = 0 : i64, tpu.core_type = #tpu.core_type<tc>, window_params = [{transform_indices = @transform_0, window_bounds = array<i64: 8, 32, 32>}, {transform_indices = @transform_1, window_bounds = array<i64: 8, 32, 1>}, {pipeline_mode = #tpu.pipeline_mode<synchronous>, transform_indices = @transform_2, window_bounds = array<i64: 32, 128>}, {transform_indices = @transform_3, window_bounds = array<i64: 8, 32, 128>}]} {
    %c0 = arith.constant 0 : index
    %c0_0 = arith.constant 0 : index
    %c0_1 = arith.constant 0 : index
    %0 = vector.load %arg1[%c0, %c0_0, %c0_1] : memref<8x32x32xbf16, #tpu.memory_space<vmem>>, vector<8x32x32xbf16>
    %1 = vector.shape_cast %0 : vector<8x32x32xbf16> to vector<256x32xbf16>
    %c0_2 = arith.constant 0 : index
    %c0_3 = arith.constant 0 : index
    %2 = vector.load %arg3[%c0_2, %c0_3] : memref<32x128xbf16, #tpu.memory_space<vmem>>, vector<32x128xbf16>
    %c0_4 = arith.constant 0 : index
    %c0_5 = arith.constant 0 : index
    %c0_6 = arith.constant 0 : index
    %3 = vector.load %arg2[%c0_4, %c0_5, %c0_6] : memref<8x32x1xf32, #tpu.memory_space<vmem>>, vector<8x32x1xf32>
    %cst = arith.constant dense<0.000000e+00> : vector<256x128xf32>
    %4 = tpu.matmul %1, %2, %cst {dimension_numbers = #tpu.dot_dimension_numbers<[1], [0], [0], [1], [0, 0, 1, 1], [], []>} : vector<256x32xbf16>, vector<32x128xbf16>, vector<256x128xf32> -> vector<256x128xf32>
    %5 = vector.shape_cast %4 : vector<256x128xf32> to vector<8x32x128xf32>
    %6 = arith.mulf %5, %5 : vector<8x32x128xf32>
    %cst_7 = arith.constant dense<0.000000e+00> : vector<8x32xf32>
    %7 = vector.multi_reduction <add>, %6, %cst_7 [2] : vector<8x32x128xf32> to vector<8x32xf32>
    %8 = vector.shape_cast %7 : vector<8x32xf32> to vector<8x32x1xf32>
    %cst_8 = arith.constant 9.99999996E-13 : f32
    %9 = vector.broadcast %cst_8 : f32 to vector<8x32x1xf32>
    %10 = arith.maximumf %8, %9 : vector<8x32x1xf32>
    %11 = math.rsqrt %10 : vector<8x32x1xf32>
    %12 = arith.mulf %11, %3 : vector<8x32x1xf32>
    %13 = vector.broadcast %12 : vector<8x32x1xf32> to vector<8x32x128xf32>
    %14 = arith.mulf %5, %13 : vector<8x32x128xf32>
    %15 = arith.truncf %14 : vector<8x32x128xf32> to vector<8x32x128xbf16>
    %c0_9 = arith.constant 0 : index
    %c0_10 = arith.constant 0 : index
    %c0_11 = arith.constant 0 : index
    %16 = vector.load %arg4[%c0_9, %c0_10, %c0_11] : memref<8x32x128xbf16, #tpu.memory_space<vmem>>, vector<8x32x128xbf16>
    tpu.vector_store %arg4[%c0_9, %c0_10, %c0_11], %15 {strides = array<i32>} : memref<8x32x128xbf16, #tpu.memory_space<vmem>>, vector<8x32x128xbf16>,
    return
  }
  func.func @transform_0(%arg0: i32) -> (i32, i32, i32) {
    %c0_i32 = arith.constant 0 : i32
    %c0_i32_0 = arith.constant 0 : i32
    %c0_i32_1 = arith.constant 0 : i32
    return %arg0, %c0_i32, %c0_i32_0 : i32, i32, i32
  }
  func.func @transform_1(%arg0: i32) -> (i32, i32, i32) {
    %c0_i32 = arith.constant 0 : i32
    %c0_i32_0 = arith.constant 0 : i32
    %c0_i32_1 = arith.constant 0 : i32
    return %arg0, %c0_i32, %c0_i32_0 : i32, i32, i32
  }
  func.func @transform_2(%arg0: i32) -> (i32, i32) {
    %c0_i32 = arith.constant 0 : i32
    %c0_i32_0 = arith.constant 0 : i32
    %c0_i32_1 = arith.constant 0 : i32
    return %c0_i32, %c0_i32_0 : i32, i32
  }
  func.func @transform_3(%arg0: i32) -> (i32, i32, i32) {
    %c0_i32 = arith.constant 0 : i32
    %c0_i32_0 = arith.constant 0 : i32
    %c0_i32_1 = arith.constant 0 : i32
    return %arg0, %c0_i32, %c0_i32_0 : i32, i32, i32
  }
}

</mosaic_0001>

<llo_original>
// kernel: tpu_custom_call.1
$region0: #{tpu_custom_call.1}
  #allocation0 [shape = 'u32[]', space=smem, size = 0x4, offset = 0x4, fixed_abs, tag = 'smem constant byte address 0x4 - core index']
  #allocation1 [shape = 'u32[144,128]{1,0:T(1,128)}', space=vmem, size = 0x12000, scoped, tag = 'internal scratch']
  %s0 = inlined_call_operand.vmem [shape: bf16[16,32,32], index: 0, kind: input, shape index: {}]
  %s1 = inlined_call_operand.vmem [shape: f32[16,32,1], index: 1, kind: input, shape index: {}]
  %s2 = inlined_call_operand.vmem [shape: bf16[32,128], index: 2, kind: input, shape index: {}]
  %s3 = inlined_call_operand.hbm [shape: bf16[16,32,128], index: 3, kind: output, shape index: {}]
  %s4 = sld [smem:[#allocation0]]
  $region45: #{tpu_custom_call.1} parent=0
    _
  %s6 = ssub.s32 1, %s4
  %s7 = scalar_select 0, %s6, %s4
  $region1: #{tpu_custom_call.1} parent=0
    #allocation2 [shape = 'u8[131072]{0}', space=vmem, size = 0x20000, scoped, tag = 'output window, operand 0']
    #allocation3 [shape = 's32[2]{0}', space=sflag, size = 0x8, scoped, tag = 'scoped memory for tpu_custom_call.1']
    %8 = vsyncpa [#allocation3], 0
    %s9 = scalar_lea.sflag [#allocation3], 1
    %10 = vsyncpa %s9, 0
    loop: start=0, step=1, limit=4
    $region2: #{tpu_custom_call.1} parent=1 // loop_pre_header
      _
    $region3: #{tpu_custom_call.1} parent=1 // loop_header
      %s12 = sphi 0, %s16
      %p13 = scmp.ge.s32.totalorder %s12, 4
      %s22 = sphi 0, %s24
      %s25 = sphi 0, %s22
      %s26 = sphi 0, %s25
      %s42 = sphi 0, %s26
      %s48 = sphi 0, %s50
      %s51 = sphi 0, %s48
      %s52 = sphi 0, %s51
      %s68 = sphi 0, %s52
      %s72 = sphi 0, %s72
      %s74 = sphi 0, %s72
      %s75 = sphi 0, %s74
      %s89 = sphi 0, %s75
      %s95 = sphi 0, %s97
      %s98 = sphi 0, %s95
      %s99 = sphi 0, %s98
      %s115 = sphi 0, %s99
    $region4: #{tpu_custom_call.1} parent=1 // loop_header_branch
      %15 = sbr.rel (%p13) target = $region8
    $region5: #{tpu_custom_call.1} parent=1 // loop_body
      %s17 = ssub.s32 %s12, 1
      %s18 = ssub.s32 %s12, 2
      %s19 = sadd.s32 %s12, 1
      %s20 = ssub.s32 %s12, %s19
      %p21 = scmp.eq.s32.totalorder %s20, 0
      %s23 = sadd.s32 %s22, 1
      %s24 = scalar_select %p21, %s22, %s23
      %p27 = pneg %p21
      %p28 = scmp.eq.s32.totalorder %s12, 1
      %p29 = por %p27, %p28
      %p30 = scmp.ne.s32.totalorder %s22, %s25
      %p31 = scmp.eq.s32.totalorder %s12, 0
      %p32 = por %p30, %p31
      %p33 = scmp.ne.s32.totalorder %s22, %s25
      %p34 = scmp.eq.s32.totalorder %s17, 1
      %p35 = por %p33, %p34
      %p36 = scmp.ne.s32.totalorder %s25, %s26
      %p37 = scmp.eq.s32.totalorder %s17, 0
      %p38 = por %p36, %p37
      %p39 = scmp.ne.s32.totalorder %s25, %s26
      %p40 = scmp.eq.s32.totalorder %s18, 1
      %p41 = por %p39, %p40
      %p43 = scmp.ne.s32.totalorder %s26, %s42
      %p44 = scmp.eq.s32.totalorder %s18, 0
      %p45 = por %p43, %p44
      %s46 = ssub.s32 %s12, %s19
      %p47 = scmp.eq.s32.totalorder %s46, 0
      %s49 = sadd.s32 %s48, 1
      %s50 = scalar_select %p47, %s48, %s49
      %p53 = pneg %p47
      %p54 = scmp.eq.s32.totalorder %s12, 1
      %p55 = por %p53, %p54
      %p56 = scmp.ne.s32.totalorder %s48, %s51
      %p57 = scmp.eq.s32.totalorder %s12, 0
      %p58 = por %p56, %p57
      %p59 = scmp.ne.s32.totalorder %s48, %s51
      %p60 = scmp.eq.s32.totalorder %s17, 1
      %p61 = por %p59, %p60
      %p62 = scmp.ne.s32.totalorder %s51, %s52
      %p63 = scmp.eq.s32.totalorder %s17, 0
      %p64 = por %p62, %p63
      %p65 = scmp.ne.s32.totalorder %s51, %s52
      %p66 = scmp.eq.s32.totalorder %s18, 1
      %p67 = por %p65, %p66
      %p69 = scmp.ne.s32.totalorder %s52, %s68
      %p70 = scmp.eq.s32.totalorder %s18, 0
      %p71 = por %p69, %p70
      %s73 = sadd.s32 %s72, 1
      %p76 = scmp.eq.s32.totalorder %s12, 1
      %p77 = scmp.ne.s32.totalorder %s72, %s74
      %p78 = scmp.eq.s32.totalorder %s12, 0
      %p79 = por %p77, %p78
      %p80 = scmp.ne.s32.totalorder %s72, %s74
      %p81 = scmp.eq.s32.totalorder %s17, 1
      %p82 = por %p80, %p81
      %p83 = scmp.ne.s32.totalorder %s74, %s75
      %p84 = scmp.eq.s32.totalorder %s17, 0
      %p85 = por %p83, %p84
      %p86 = scmp.ne.s32.totalorder %s74, %s75
      %p87 = scmp.eq.s32.totalorder %s18, 1
      %p88 = por %p86, %p87
      %p90 = scmp.ne.s32.totalorder %s75, %s89
      %p91 = scmp.eq.s32.totalorder %s18, 0
      %p92 = por %p90, %p91
      %s93 = ssub.s32 %s12, %s19
      %p94 = scmp.eq.s32.totalorder %s93, 0
      %s96 = sadd.s32 %s95, 1
      %s97 = scalar_select %p94, %s95, %s96
      %p100 = pneg %p94
      %p101 = scmp.eq.s32.totalorder %s12, 1
      %p102 = por %p100, %p101
      %p103 = scmp.ne.s32.totalorder %s95, %s98
      %p104 = scmp.eq.s32.totalorder %s12, 0
      %p105 = por %p103, %p104
      %p106 = scmp.ne.s32.totalorder %s95, %s98
      %p107 = scmp.eq.s32.totalorder %s17, 1
      %p108 = por %p106, %p107
      %p109 = scmp.ne.s32.totalorder %s98, %s99
      %p110 = scmp.eq.s32.totalorder %s17, 0
      %p111 = por %p109, %p110
      %p112 = scmp.ne.s32.totalorder %s98, %s99
      %p113 = scmp.eq.s32.totalorder %s18, 1
      %p114 = por %p112, %p113
      %p116 = scmp.ne.s32.totalorder %s99, %s115
      %p117 = scmp.eq.s32.totalorder %s18, 0
      %p118 = por %p116, %p117
      %p119 = scmp.le.s32.totalorder 1, %s12
      %p120 = scmp.lt.s32.totalorder %s12, 3
      %p121 = pnand %p119, %p120
      %p122 = pneg %p121
      // Predicated region
      $region9: #{tpu_custom_call.1} parent=5 // pred_check
        _
      $region10: #{tpu_custom_call.1} parent=5 // pred_check_branch
        %124 = sbr.rel (%p121) target = $region12
      $region11: #{tpu_custom_call.1} parent=5 // pred_region
        %s125 = ssub.s32 %s12, 1
        // Predicated region
        $region13: #{tpu_custom_call.1} parent=11 // pred_check
          %p126 = pneg %p85
        $region14: #{tpu_custom_call.1} parent=11 // pred_check_branch
          %128 = sbr.rel (%p126) target = $region16
        $region15: #{tpu_custom_call.1} parent=11 // pred_region
          _
        $region16: #{tpu_custom_call.1} parent=11 // pred_fallthru
          _
      $region12: #{tpu_custom_call.1} parent=5 // pred_fallthru
        _
      %p129 = scmp.lt.s32.totalorder %s12, 2
      // Predicated region
      $region17: #{tpu_custom_call.1} parent=5 // pred_check
        %p130 = pneg %p129
      $region18: #{tpu_custom_call.1} parent=5 // pred_check_branch
        %132 = sbr.rel (%p130) target = $region20
      $region19: #{tpu_custom_call.1} parent=5 // pred_region
        // Predicated region
        $region21: #{tpu_custom_call.1} parent=19 // pred_check
          %p133 = pneg %p32
        $region22: #{tpu_custom_call.1} parent=19 // pred_check_branch
          %135 = sbr.rel (%p133) target = $region24
        $region23: #{tpu_custom_call.1} parent=19 // pred_region
          %s136 = smul.u32 8, %s12
          %p137 = scmp.lt.s32.totalorder %s136, 15
          %s138 = scalar_select %p137, %s136, 15
          %s139 = smul.addr %s138, 4
          %s140 = smul.addr %s139, 4
          %s141 = scalar_lea.vmem %s0, %s140
          %s142 = smul.u32 8, %s12
        $region24: #{tpu_custom_call.1} parent=19 // pred_fallthru
          _
        // Predicated region
        $region25: #{tpu_custom_call.1} parent=19 // pred_check
          %p143 = pneg %p58
        $region26: #{tpu_custom_call.1} parent=19 // pred_check_branch
          %145 = sbr.rel (%p143) target = $region28
        $region27: #{tpu_custom_call.1} parent=19 // pred_region
          %s146 = smul.u32 8, %s12
          %p147 = scmp.lt.s32.totalorder %s146, 15
          %s148 = scalar_select %p147, %s146, 15
          %s149 = smul.addr %s148, 4
          %s150 = smul.addr %s149, 8
          %s151 = scalar_lea.vmem %s1, %s150
          %s152 = smul.u32 8, %s12
        $region28: #{tpu_custom_call.1} parent=19 // pred_fallthru
          _
      $region20: #{tpu_custom_call.1} parent=5 // pred_fallthru
        _
      %p153 = scmp.le.s32.totalorder 1, %s12
      %p154 = scmp.lt.s32.totalorder %s12, 3
      %p155 = pnand %p153, %p154
      %p156 = pneg %p155
      // Predicated region
      $region29: #{tpu_custom_call.1} parent=5 // pred_check
        _
      $region30: #{tpu_custom_call.1} parent=5 // pred_check_branch
        %158 = sbr.rel (%p155) target = $region32
      $region31: #{tpu_custom_call.1} parent=5 // pred_region
        %s159 = ssub.s32 %s12, 1
        %s160 = smul.u32 8, %s17
        %p161 = scmp.lt.s32.totalorder %s160, 15
        %s162 = scalar_select %p161, %s160, 15
        %s163 = smul.addr %s162, 4
        %s164 = smul.addr %s163, 4
        %s165 = scalar_lea.vmem %s0, %s164
        %p166 = pneg %p38
        %p167 = pneg %p35
        %s168 = smul.u32 8, %s17
        %p169 = scmp.lt.s32.totalorder %s168, 15
        %s170 = scalar_select %p169, %s168, 15
        %s171 = smul.addr %s170, 4
        %s172 = smul.addr %s171, 8
        %s173 = scalar_lea.vmem %s1, %s172
        %p174 = pneg %p64
        %p175 = pneg %p61
        %p176 = pneg %p85
        %p177 = pneg %p82
        %p178 = pneg %p111
        %p179 = pneg %p108
        %s180 = sand.u32 %s98, 1
        %s181 = scalar_lea.sflag [#allocation3], %s180
        %s182 = sand.u32 %s98, 1
        %s183 = smul.addr %s182, 128
        %s184 = scalar_lea.vmem [#allocation2], %s183
        %s185 = smul.u32 8, %s17
        %p186 = scmp.lt.s32.totalorder %s185, 15
        %s187 = scalar_select %p186, %s185, 15
        %s188 = smul.addr %s187, 4
        %s189 = smul.addr %s188, 4
        %s190 = scalar_lea.vmem %s0, %s189
        %s191 = smul.u32 8, %s17
        %s192 = smul.u32 8, %s17
        %p193 = scmp.lt.s32.totalorder %s192, 15
        %s194 = scalar_select %p193, %s192, 15
        %s195 = smul.addr %s194, 4
        %s196 = smul.addr %s195, 8
        %s197 = scalar_lea.vmem %s1, %s196
        %s198 = smul.u32 8, %s17
        %s199 = smul.u32 8, %s17
        %v201 = vld [vmem:[%s190] sm:$0xf]
        %v202 = vld [vmem:[%s190 + $0x4] sm:$0xf]
        %v203 = vld [vmem:[%s190 + $0x8] sm:$0xf]
        %v204 = vld [vmem:[%s190 + $0xc] sm:$0xf]
        %v205 = vld [vmem:[%s190 + $0x10] sm:$0xf]
        %v206 = vld [vmem:[%s190 + $0x14] sm:$0xf]
        %v207 = vld [vmem:[%s190 + $0x18] sm:$0xf]
        %v208 = vld [vmem:[%s190 + $0x1c] sm:$0xf]
        %v209 = vld [vmem:[%s190 + $0x20] sm:$0xf]
        %v210 = vld [vmem:[%s190 + $0x24] sm:$0xf]
        %v211 = vld [vmem:[%s190 + $0x28] sm:$0xf]
        %v212 = vld [vmem:[%s190 + $0x2c] sm:$0xf]
        %v213 = vld [vmem:[%s190 + $0x30] sm:$0xf]
        %v214 = vld [vmem:[%s190 + $0x34] sm:$0xf]
        %v215 = vld [vmem:[%s190 + $0x38] sm:$0xf]
        %v216 = vld [vmem:[%s190 + $0x3c] sm:$0xf]
        %v217 = vld [vmem:[%s190 + $0x40] sm:$0xf]
        %v218 = vld [vmem:[%s190 + $0x44] sm:$0xf]
        %v219 = vld [vmem:[%s190 + $0x48] sm:$0xf]
        %v220 = vld [vmem:[%s190 + $0x4c] sm:$0xf]
        %v221 = vld [vmem:[%s190 + $0x50] sm:$0xf]
        %v222 = vld [vmem:[%s190 + $0x54] sm:$0xf]
        %v223 = vld [vmem:[%s190 + $0x58] sm:$0xf]
        %v224 = vld [vmem:[%s190 + $0x5c] sm:$0xf]
        %v225 = vld [vmem:[%s190 + $0x60] sm:$0xf]
        %v226 = vld [vmem:[%s190 + $0x64] sm:$0xf]
        %v227 = vld [vmem:[%s190 + $0x68] sm:$0xf]
        %v228 = vld [vmem:[%s190 + $0x6c] sm:$0xf]
        %v229 = vld [vmem:[%s190 + $0x70] sm:$0xf]
        %v230 = vld [vmem:[%s190 + $0x74] sm:$0xf]
        %v231 = vld [vmem:[%s190 + $0x78] sm:$0xf]
        %v232 = vld [vmem:[%s190 + $0x7c] sm:$0xf]
        %v233 = vld [vmem:[%s2] sm:$0xf]
        %v234 = vld [vmem:[%s2 + $0x4] sm:$0xf]
        %v235 = vld [vmem:[%s2 + $0x8] sm:$0xf]
        %v236 = vld [vmem:[%s2 + $0xc] sm:$0xf]
        %v237 = vld [vmem:[%s197] sm:$0xff]
        %v238 = vld [vmem:[%s197 + $0x8] sm:$0xff]
        %v239 = vld [vmem:[%s197 + $0x10] sm:$0xff]
        %v240 = vld [vmem:[%s197 + $0x18] sm:$0xff]
        %v241 = vld [vmem:[%s197 + $0x20] sm:$0xff]
        %v242 = vld [vmem:[%s197 + $0x28] sm:$0xff]
        %v243 = vld [vmem:[%s197 + $0x30] sm:$0xff]
        %v244 = vld [vmem:[%s197 + $0x38] sm:$0xff]
        %v245 = vld [vmem:[%s197 + $0x40] sm:$0xff]
        %v246 = vld [vmem:[%s197 + $0x48] sm:$0xff]
        %v247 = vld [vmem:[%s197 + $0x50] sm:$0xff]
        %v248 = vld [vmem:[%s197 + $0x58] sm:$0xff]
        %v249 = vld [vmem:[%s197 + $0x60] sm:$0xff]
        %v250 = vld [vmem:[%s197 + $0x68] sm:$0xff]
        %v251 = vld [vmem:[%s197 + $0x70] sm:$0xff]
        %v252 = vld [vmem:[%s197 + $0x78] sm:$0xff]
        %v253 = vld [vmem:[%s197 + $0x80] sm:$0xff]
        %v254 = vld [vmem:[%s197 + $0x88] sm:$0xff]
        %v255 = vld [vmem:[%s197 + $0x90] sm:$0xff]
        %v256 = vld [vmem:[%s197 + $0x98] sm:$0xff]
        %v257 = vld [vmem:[%s197 + $0xa0] sm:$0xff]
        %v258 = vld [vmem:[%s197 + $0xa8] sm:$0xff]
        %v259 = vld [vmem:[%s197 + $0xb0] sm:$0xff]
        %v260 = vld [vmem:[%s197 + $0xb8] sm:$0xff]
        %v261 = vld [vmem:[%s197 + $0xc0] sm:$0xff]
        %v262 = vld [vmem:[%s197 + $0xc8] sm:$0xff]
        %v263 = vld [vmem:[%s197 + $0xd0] sm:$0xff]
        %v264 = vld [vmem:[%s197 + $0xd8] sm:$0xff]
        %v265 = vld [vmem:[%s197 + $0xe0] sm:$0xff]
        %v266 = vld [vmem:[%s197 + $0xe8] sm:$0xff]
        %v267 = vld [vmem:[%s197 + $0xf0] sm:$0xff]
        %v268 = vld [vmem:[%s197 + $0xf8] sm:$0xff]
        %v301 = vunpack.c.l.b16 %v201
        %v302 = vunpack.c.l.b16 %v202
        %v303 = vunpack.c.l.b16 %v203
        %v304 = vunpack.c.l.b16 %v204
        %v305 = vunpack.c.l.b16 %v205
        %v306 = vunpack.c.l.b16 %v206
        %v307 = vunpack.c.l.b16 %v207
        %v308 = vunpack.c.l.b16 %v208
        %v309 = vunpack.c.l.b16 %v209
        %v310 = vunpack.c.l.b16 %v210
        %v311 = vunpack.c.l.b16 %v211
        %v312 = vunpack.c.l.b16 %v212
        %v313 = vunpack.c.l.b16 %v213
        %v314 = vunpack.c.l.b16 %v214
        %v315 = vunpack.c.l.b16 %v215
        %v316 = vunpack.c.l.b16 %v216
        %v317 = vunpack.c.l.b16 %v217
        %v318 = vunpack.c.l.b16 %v218
        %v319 = vunpack.c.l.b16 %v219
        %v320 = vunpack.c.l.b16 %v220
        %v321 = vunpack.c.l.b16 %v221
        %v322 = vunpack.c.l.b16 %v222
        %v323 = vunpack.c.l.b16 %v223
        %v324 = vunpack.c.l.b16 %v224
        %v325 = vunpack.c.l.b16 %v225
        %v326 = vunpack.c.l.b16 %v226
        %v327 = vunpack.c.l.b16 %v227
        %v328 = vunpack.c.l.b16 %v228
        %v329 = vunpack.c.l.b16 %v229
        %v330 = vunpack.c.l.b16 %v230
        %v331 = vunpack.c.l.b16 %v231
        %v332 = vunpack.c.l.b16 %v232
        %v333 = vpack.c.b16 %v302, %v301
        %v334 = vpack.c.b16 %v304, %v303
        %v335 = vpack.c.b16 %v306, %v305
        %v336 = vpack.c.b16 %v308, %v307
        %v337 = vpack.c.b16 %v310, %v309
        %v338 = vpack.c.b16 %v312, %v311
        %v339 = vpack.c.b16 %v314, %v313
        %v340 = vpack.c.b16 %v316, %v315
        %v341 = vpack.c.b16 %v318, %v317
        %v342 = vpack.c.b16 %v320, %v319
        %v343 = vpack.c.b16 %v322, %v321
        %v344 = vpack.c.b16 %v324, %v323
        %v345 = vpack.c.b16 %v326, %v325
        %v346 = vpack.c.b16 %v328, %v327
        %v347 = vpack.c.b16 %v330, %v329
        %v348 = vpack.c.b16 %v332, %v331
        %v353 = vunpack.c.l.b16 %v233
        %v354 = vunpack.c.l.b16 %v234
        %v355 = vunpack.c.l.b16 %v235
        %v356 = vunpack.c.l.b16 %v236
        %v357 = vpack.c.b16 %v354, %v353
        %v358 = vpack.c.b16 %v356, %v355
        %vm361 = vcmask 261120
        %v363 = vsel %vm361, %v333, 0
        %v366 = vsel %vm361, %v334, 0
        %v369 = vsel %vm361, %v335, 0
        %v372 = vsel %vm361, %v336, 0
        %v375 = vsel %vm361, %v337, 0
        %v378 = vsel %vm361, %v338, 0
        %v381 = vsel %vm361, %v339, 0
        %v384 = vsel %vm361, %v340, 0
        %v387 = vsel %vm361, %v341, 0
        %v390 = vsel %vm361, %v342, 0
        %v393 = vsel %vm361, %v343, 0
        %v396 = vsel %vm361, %v344, 0
        %v399 = vsel %vm361, %v345, 0
        %v402 = vsel %vm361, %v346, 0
        %v405 = vsel %vm361, %v347, 0
        %v408 = vsel %vm361, %v348, 0
        %410 = vmatprep.subr.bf16.mxu0 0
        %411 = vmatpush1.bf16.msra.mxu0 %v357
        %412 = vmatprep.subr.bf16.mxu0 0
        %413 = vmatpush1.bf16.msra.mxu0 %v358
        %414 = vmatprep.subr.bf16.mxu0 0
        %415 = vmatpush1.bf16.msra.mxu0 0
        %416 = vmatprep.subr.bf16.mxu0 0
        %417 = vmatpush1.bf16.msra.mxu0 0
        %418 = vmatprep.subr.bf16.mxu0 0
        %419 = vmatpush1.bf16.msra.mxu0 0
        %420 = vmatprep.subr.bf16.mxu0 0
        %421 = vmatpush1.bf16.msra.mxu0 0
        %422 = vmatprep.subr.bf16.mxu0 0
        %423 = vmatpush1.bf16.msra.mxu0 0
        %424 = vmatprep.subr.bf16.mxu0 0
        %425 = vmatpush1.bf16.msra.mxu0 0
        %426 = vmatprep.subr.bf16.mxu0 0
        %427 = vmatpush1.bf16.msra.mxu0 0
        %428 = vmatprep.subr.bf16.mxu0 0
        %429 = vmatpush1.bf16.msra.mxu0 0
        %430 = vmatprep.subr.bf16.mxu0 0
        %431 = vmatpush1.bf16.msra.mxu0 0
        %432 = vmatprep.subr.bf16.mxu0 0
        %433 = vmatpush1.bf16.msra.mxu0 0
        %434 = vmatprep.subr.bf16.mxu0 0
        %435 = vmatpush1.bf16.msra.mxu0 0
        %436 = vmatprep.subr.bf16.mxu0 0
        %437 = vmatpush1.bf16.msra.mxu0 0
        %438 = vmatprep.subr.bf16.mxu0 0
        %439 = vmatpush1.bf16.msra.mxu0 0
        %440 = vmatprep.subr.bf16.mxu0 0
        %441 = vmatpush1.bf16.msra.mxu0 0
        %442 = vmatprep.mubr.bf16.mxu0 0
        %443 = vmatmul.mubr.bf16.gmra.mrb[0].mxu0 %v363
        %v444 = vpop.f32.mrb[0].mxu0
        %v445 = vadd.f32 0.0, %v444
        %v446 = vpop.f32.mrb[0].mxu0
        %v447 = vpop.f32.mrb[0].mxu0
        %v448 = vadd.f32 0.0, %v447
        %v449 = vpop.f32.mrb[0].mxu0
        %450 = vmatprep.mubr.bf16.mxu0 0
        %451 = vmatmul.mubr.bf16.gmra.mrb[0].mxu0 %v366
        %v452 = vpop.f32.mrb[0].mxu0
        %v453 = vadd.f32 0.0, %v452
        %v454 = vpop.f32.mrb[0].mxu0
        %v455 = vpop.f32.mrb[0].mxu0
        %v456 = vadd.f32 0.0, %v455
        %v457 = vpop.f32.mrb[0].mxu0
        %458 = vmatprep.mubr.bf16.mxu0 0
        %459 = vmatmul.mubr.bf16.gmra.mrb[0].mxu0 %v369
        %v460 = vpop.f32.mrb[0].mxu0
        %v461 = vadd.f32 0.0, %v460
        %v462 = vpop.f32.mrb[0].mxu0
        %v463 = vpop.f32.mrb[0].mxu0
        %v464 = vadd.f32 0.0, %v463
        %v465 = vpop.f32.mrb[0].mxu0
        %466 = vmatprep.mubr.bf16.mxu0 0
        %467 = vmatmul.mubr.bf16.gmra.mrb[0].mxu0 %v372
        %v468 = vpop.f32.mrb[0].mxu0
        %v469 = vadd.f32 0.0, %v468
        %v470 = vpop.f32.mrb[0].mxu0
        %v471 = vpop.f32.mrb[0].mxu0
        %v472 = vadd.f32 0.0, %v471
        %v473 = vpop.f32.mrb[0].mxu0
        %474 = vmatprep.mubr.bf16.mxu0 0
        %475 = vmatmul.mubr.bf16.gmra.mrb[0].mxu0 %v375
        %v476 = vpop.f32.mrb[0].mxu0
        %v477 = vadd.f32 0.0, %v476
        %v478 = vpop.f32.mrb[0].mxu0
        %v479 = vpop.f32.mrb[0].mxu0
        %v480 = vadd.f32 0.0, %v479
        %v481 = vpop.f32.mrb[0].mxu0
        %482 = vmatprep.mubr.bf16.mxu0 0
        %483 = vmatmul.mubr.bf16.gmra.mrb[0].mxu0 %v378
        %v484 = vpop.f32.mrb[0].mxu0
        %v485 = vadd.f32 0.0, %v484
        %v486 = vpop.f32.mrb[0].mxu0
        %v487 = vpop.f32.mrb[0].mxu0
        %v488 = vadd.f32 0.0, %v487
        %v489 = vpop.f32.mrb[0].mxu0
        %490 = vmatprep.mubr.bf16.mxu0 0
        %491 = vmatmul.mubr.bf16.gmra.mrb[0].mxu0 %v381
        %v492 = vpop.f32.mrb[0].mxu0
        %v493 = vadd.f32 0.0, %v492
        %v494 = vpop.f32.mrb[0].mxu0
        %v495 = vpop.f32.mrb[0].mxu0
        %v496 = vadd.f32 0.0, %v495
        %v497 = vpop.f32.mrb[0].mxu0
        %498 = vmatprep.mubr.bf16.mxu0 0
        %499 = vmatmul.mubr.bf16.gmra.mrb[0].mxu0 %v384
        %v500 = vpop.f32.mrb[0].mxu0
        %v501 = vadd.f32 0.0, %v500
        %v502 = vpop.f32.mrb[0].mxu0
        %v503 = vpop.f32.mrb[0].mxu0
        %v504 = vadd.f32 0.0, %v503
        %v505 = vpop.f32.mrb[0].mxu0
        %506 = vmatprep.mubr.bf16.mxu0 0
        %507 = vmatmul.mubr.bf16.gmra.mrb[0].mxu0 %v387
        %v508 = vpop.f32.mrb[0].mxu0
        %v509 = vadd.f32 0.0, %v508
        %v510 = vpop.f32.mrb[0].mxu0
        %v511 = vpop.f32.mrb[0].mxu0
        %v512 = vadd.f32 0.0, %v511
        %v513 = vpop.f32.mrb[0].mxu0
        %514 = vmatprep.mubr.bf16.mxu0 0
        %515 = vmatmul.mubr.bf16.gmra.mrb[0].mxu0 %v390
        %v516 = vpop.f32.mrb[0].mxu0
        %v517 = vadd.f32 0.0, %v516
        %v518 = vpop.f32.mrb[0].mxu0
        %v519 = vpop.f32.mrb[0].mxu0
        %v520 = vadd.f32 0.0, %v519
        %v521 = vpop.f32.mrb[0].mxu0
        %522 = vmatprep.mubr.bf16.mxu0 0
        %523 = vmatmul.mubr.bf16.gmra.mrb[0].mxu0 %v393
        %v524 = vpop.f32.mrb[0].mxu0
        %v525 = vadd.f32 0.0, %v524
        %v526 = vpop.f32.mrb[0].mxu0
        %v527 = vpop.f32.mrb[0].mxu0
        %v528 = vadd.f32 0.0, %v527
        %v529 = vpop.f32.mrb[0].mxu0
        %530 = vmatprep.mubr.bf16.mxu0 0
        %531 = vmatmul.mubr.bf16.gmra.mrb[0].mxu0 %v396
        %v532 = vpop.f32.mrb[0].mxu0
        %v533 = vadd.f32 0.0, %v532
        %v534 = vpop.f32.mrb[0].mxu0
        %v535 = vpop.f32.mrb[0].mxu0
        %v536 = vadd.f32 0.0, %v535
        %v537 = vpop.f32.mrb[0].mxu0
        %538 = vmatprep.mubr.bf16.mxu0 0
        %539 = vmatmul.mubr.bf16.gmra.mrb[0].mxu0 %v399
        %v540 = vpop.f32.mrb[0].mxu0
        %v541 = vadd.f32 0.0, %v540
        %v542 = vpop.f32.mrb[0].mxu0
        %v543 = vpop.f32.mrb[0].mxu0
        %v544 = vadd.f32 0.0, %v543
        %v545 = vpop.f32.mrb[0].mxu0
        %546 = vmatprep.mubr.bf16.mxu0 0
        %547 = vmatmul.mubr.bf16.gmra.mrb[0].mxu0 %v402
        %v548 = vpop.f32.mrb[0].mxu0
        %v549 = vadd.f32 0.0, %v548
        %v550 = vpop.f32.mrb[0].mxu0
        %v551 = vpop.f32.mrb[0].mxu0
        %v552 = vadd.f32 0.0, %v551
        %v553 = vpop.f32.mrb[0].mxu0
        %554 = vmatprep.mubr.bf16.mxu0 0
        %555 = vmatmul.mubr.bf16.gmra.mrb[0].mxu0 %v405
        %v556 = vpop.f32.mrb[0].mxu0
        %v557 = vadd.f32 0.0, %v556
        %v558 = vpop.f32.mrb[0].mxu0
        %v559 = vpop.f32.mrb[0].mxu0
        %v560 = vadd.f32 0.0, %v559
        %v561 = vpop.f32.mrb[0].mxu0
        %562 = vmatprep.mubr.bf16.mxu0 0
        %563 = vmatmul.mubr.bf16.gmra.mrb[0].mxu0 %v408
        %v564 = vpop.f32.mrb[0].mxu0
        %v565 = vadd.f32 0.0, %v564
        %v566 = vpop.f32.mrb[0].mxu0
        %v567 = vpop.f32.mrb[0].mxu0
        %v568 = vadd.f32 0.0, %v567
        %v569 = vpop.f32.mrb[0].mxu0
        %570 = vdwg.mxu0
        %v571 = vmul.f32 %v445, %v445
        %v572 = vmul.f32 %v448, %v448
        %v573 = vmul.f32 %v453, %v453
        %v574 = vmul.f32 %v456, %v456
        %v575 = vmul.f32 %v461, %v461
        %v576 = vmul.f32 %v464, %v464
        %v577 = vmul.f32 %v469, %v469
        %v578 = vmul.f32 %v472, %v472
        %v579 = vmul.f32 %v477, %v477
        %v580 = vmul.f32 %v480, %v480
        %v581 = vmul.f32 %v485, %v485
        %v582 = vmul.f32 %v488, %v488
        %v583 = vmul.f32 %v493, %v493
        %v584 = vmul.f32 %v496, %v496
        %v585 = vmul.f32 %v501, %v501
        %v586 = vmul.f32 %v504, %v504
        %v587 = vmul.f32 %v509, %v509
        %v588 = vmul.f32 %v512, %v512
        %v589 = vmul.f32 %v517, %v517
        %v590 = vmul.f32 %v520, %v520
        %v591 = vmul.f32 %v525, %v525
        %v592 = vmul.f32 %v528, %v528
        %v593 = vmul.f32 %v533, %v533
        %v594 = vmul.f32 %v536, %v536
        %v595 = vmul.f32 %v541, %v541
        %v596 = vmul.f32 %v544, %v544
        %v597 = vmul.f32 %v549, %v549
        %v598 = vmul.f32 %v552, %v552
        %v599 = vmul.f32 %v557, %v557
        %v600 = vmul.f32 %v560, %v560
        %v601 = vmul.f32 %v565, %v565
        %v602 = vmul.f32 %v568, %v568
        %603 = vadd.xlane.f32.xlu0 %v571
        %v604 = vpop.xlane.xlu0 %603
        %605 = vadd.xlane.f32.xlu0 %v572
        %v606 = vpop.xlane.xlu0 %605
        %607 = vadd.xlane.f32.xlu0 %v573
        %v608 = vpop.xlane.xlu0 %607
        %609 = vadd.xlane.f32.xlu0 %v574
        %v610 = vpop.xlane.xlu0 %609
        %611 = vadd.xlane.f32.xlu0 %v575
        %v612 = vpop.xlane.xlu0 %611
        %613 = vadd.xlane.f32.xlu0 %v576
        %v614 = vpop.xlane.xlu0 %613
        %615 = vadd.xlane.f32.xlu0 %v577
        %v616 = vpop.xlane.xlu0 %615
        %617 = vadd.xlane.f32.xlu0 %v578
        %v618 = vpop.xlane.xlu0 %617
        %619 = vadd.xlane.f32.xlu0 %v579
        %v620 = vpop.xlane.xlu0 %619
        %621 = vadd.xlane.f32.xlu0 %v580
        %v622 = vpop.xlane.xlu0 %621
        %623 = vadd.xlane.f32.xlu0 %v581
        %v624 = vpop.xlane.xlu0 %623
        %625 = vadd.xlane.f32.xlu0 %v582
        %v626 = vpop.xlane.xlu0 %625
        %627 = vadd.xlane.f32.xlu0 %v583
        %v628 = vpop.xlane.xlu0 %627
        %629 = vadd.xlane.f32.xlu0 %v584
        %v630 = vpop.xlane.xlu0 %629
        %631 = vadd.xlane.f32.xlu0 %v585
        %v632 = vpop.xlane.xlu0 %631
        %633 = vadd.xlane.f32.xlu0 %v586
        %v634 = vpop.xlane.xlu0 %633
        %635 = vadd.xlane.f32.xlu0 %v587
        %v636 = vpop.xlane.xlu0 %635
        %637 = vadd.xlane.f32.xlu0 %v588
        %v638 = vpop.xlane.xlu0 %637
        %639 = vadd.xlane.f32.xlu0 %v589
        %v640 = vpop.xlane.xlu0 %639
        %641 = vadd.xlane.f32.xlu0 %v590
        %v642 = vpop.xlane.xlu0 %641
        %643 = vadd.xlane.f32.xlu0 %v591
        %v644 = vpop.xlane.xlu0 %643
        %645 = vadd.xlane.f32.xlu0 %v592
        %v646 = vpop.xlane.xlu0 %645
        %647 = vadd.xlane.f32.xlu0 %v593
        %v648 = vpop.xlane.xlu0 %647
        %649 = vadd.xlane.f32.xlu0 %v594
        %v650 = vpop.xlane.xlu0 %649
        %651 = vadd.xlane.f32.xlu0 %v595
        %v652 = vpop.xlane.xlu0 %651
        %653 = vadd.xlane.f32.xlu0 %v596
        %v654 = vpop.xlane.xlu0 %653
        %655 = vadd.xlane.f32.xlu0 %v597
        %v656 = vpop.xlane.xlu0 %655
        %657 = vadd.xlane.f32.xlu0 %v598
        %v658 = vpop.xlane.xlu0 %657
        %659 = vadd.xlane.f32.xlu0 %v599
        %v660 = vpop.xlane.xlu0 %659
        %661 = vadd.xlane.f32.xlu0 %v600
        %v662 = vpop.xlane.xlu0 %661
        %663 = vadd.xlane.f32.xlu0 %v601
        %v664 = vpop.xlane.xlu0 %663
        %665 = vadd.xlane.f32.xlu0 %v602
        %v666 = vpop.xlane.xlu0 %665
        %v667 = vmax.f32 %v604, 1e-12
        %v668 = vmax.f32 %v606, 1e-12
        %v669 = vmax.f32 %v608, 1e-12
        %v670 = vmax.f32 %v610, 1e-12
        %v671 = vmax.f32 %v612, 1e-12
        %v672 = vmax.f32 %v614, 1e-12
        %v673 = vmax.f32 %v616, 1e-12
        %v674 = vmax.f32 %v618, 1e-12
        %v675 = vmax.f32 %v620, 1e-12
        %v676 = vmax.f32 %v622, 1e-12
        %v677 = vmax.f32 %v624, 1e-12
        %v678 = vmax.f32 %v626, 1e-12
        %v679 = vmax.f32 %v628, 1e-12
        %v680 = vmax.f32 %v630, 1e-12
        %v681 = vmax.f32 %v632, 1e-12
        %v682 = vmax.f32 %v634, 1e-12
        %v683 = vmax.f32 %v636, 1e-12
        %v684 = vmax.f32 %v638, 1e-12
        %v685 = vmax.f32 %v640, 1e-12
        %v686 = vmax.f32 %v642, 1e-12
        %v687 = vmax.f32 %v644, 1e-12
        %v688 = vmax.f32 %v646, 1e-12
        %v689 = vmax.f32 %v648, 1e-12
        %v690 = vmax.f32 %v650, 1e-12
        %v691 = vmax.f32 %v652, 1e-12
        %v692 = vmax.f32 %v654, 1e-12
        %v693 = vmax.f32 %v656, 1e-12
        %v694 = vmax.f32 %v658, 1e-12
        %v695 = vmax.f32 %v660, 1e-12
        %v696 = vmax.f32 %v662, 1e-12
        %v697 = vmax.f32 %v664, 1e-12
        %v698 = vmax.f32 %v666, 1e-12
        %v699 = vrsqrt.pop %v667
        %v700 = vrsqrt.pop %v668
        %v701 = vrsqrt.pop %v669
        %v702 = vrsqrt.pop %v670
        %v703 = vrsqrt.pop %v671
        %v704 = vrsqrt.pop %v672
        %v705 = vrsqrt.pop %v673
        %v706 = vrsqrt.pop %v674
        %v707 = vrsqrt.pop %v675
        %v708 = vrsqrt.pop %v676
        %v709 = vrsqrt.pop %v677
        %v710 = vrsqrt.pop %v678
        %v711 = vrsqrt.pop %v679
        %v712 = vrsqrt.pop %v680
        %v713 = vrsqrt.pop %v681
        %v714 = vrsqrt.pop %v682
        %v715 = vrsqrt.pop %v683
        %v716 = vrsqrt.pop %v684
        %v717 = vrsqrt.pop %v685
        %v718 = vrsqrt.pop %v686
        %v719 = vrsqrt.pop %v687
        %v720 = vrsqrt.pop %v688
        %v721 = vrsqrt.pop %v689
        %v722 = vrsqrt.pop %v690
        %v723 = vrsqrt.pop %v691
        %v724 = vrsqrt.pop %v692
        %v725 = vrsqrt.pop %v693
        %v726 = vrsqrt.pop %v694
        %v727 = vrsqrt.pop %v695
        %v728 = vrsqrt.pop %v696
        %v729 = vrsqrt.pop %v697
        %v730 = vrsqrt.pop %v698
        %v731 = vmul.f32 %v699, %v237
        %v732 = vmul.f32 %v700, %v238
        %v733 = vmul.f32 %v701, %v239
        %v734 = vmul.f32 %v702, %v240
        %v735 = vmul.f32 %v703, %v241
        %v736 = vmul.f32 %v704, %v242
        %v737 = vmul.f32 %v705, %v243
        %v738 = vmul.f32 %v706, %v244
        %v739 = vmul.f32 %v707, %v245
        %v740 = vmul.f32 %v708, %v246
        %v741 = vmul.f32 %v709, %v247
        %v742 = vmul.f32 %v710, %v248
        %v743 = vmul.f32 %v711, %v249
        %v744 = vmul.f32 %v712, %v250
        %v745 = vmul.f32 %v713, %v251
        %v746 = vmul.f32 %v714, %v252
        %v747 = vmul.f32 %v715, %v253
        %v748 = vmul.f32 %v716, %v254
        %v749 = vmul.f32 %v717, %v255
        %v750 = vmul.f32 %v718, %v256
        %v751 = vmul.f32 %v719, %v257
        %v752 = vmul.f32 %v720, %v258
        %v753 = vmul.f32 %v721, %v259
        %v754 = vmul.f32 %v722, %v260
        %v755 = vmul.f32 %v723, %v261
        %v756 = vmul.f32 %v724, %v262
        %v757 = vmul.f32 %v725, %v263
        %v758 = vmul.f32 %v726, %v264
        %v759 = vmul.f32 %v727, %v265
        %v760 = vmul.f32 %v728, %v266
        %v761 = vmul.f32 %v729, %v267
        %v762 = vmul.f32 %v730, %v268
        %764 = vset.pattern.permute.xlu0 0
        %765 = vperm.xlu0 %764, %v731
        %v766 = vpop.permute.xlu0 %765
        %769 = vset.pattern.permute.xlu0 0
        %770 = vperm.xlu0 %769, %v732
        %v771 = vpop.permute.xlu0 %770
        %774 = vset.pattern.permute.xlu0 0
        %775 = vperm.xlu0 %774, %v733
        %v776 = vpop.permute.xlu0 %775
        %779 = vset.pattern.permute.xlu0 0
        %780 = vperm.xlu0 %779, %v734
        %v781 = vpop.permute.xlu0 %780
        %784 = vset.pattern.permute.xlu0 0
        %785 = vperm.xlu0 %784, %v735
        %v786 = vpop.permute.xlu0 %785
        %789 = vset.pattern.permute.xlu0 0
        %790 = vperm.xlu0 %789, %v736
        %v791 = vpop.permute.xlu0 %790
        %794 = vset.pattern.permute.xlu0 0
        %795 = vperm.xlu0 %794, %v737
        %v796 = vpop.permute.xlu0 %795
        %799 = vset.pattern.permute.xlu0 0
        %800 = vperm.xlu0 %799, %v738
        %v801 = vpop.permute.xlu0 %800
        %804 = vset.pattern.permute.xlu0 0
        %805 = vperm.xlu0 %804, %v739
        %v806 = vpop.permute.xlu0 %805
        %809 = vset.pattern.permute.xlu0 0
        %810 = vperm.xlu0 %809, %v740
        %v811 = vpop.permute.xlu0 %810
        %814 = vset.pattern.permute.xlu0 0
        %815 = vperm.xlu0 %814, %v741
        %v816 = vpop.permute.xlu0 %815
        %819 = vset.pattern.permute.xlu0 0
        %820 = vperm.xlu0 %819, %v742
        %v821 = vpop.permute.xlu0 %820
        %824 = vset.pattern.permute.xlu0 0
        %825 = vperm.xlu0 %824, %v743
        %v826 = vpop.permute.xlu0 %825
        %829 = vset.pattern.permute.xlu0 0
        %830 = vperm.xlu0 %829, %v744
        %v831 = vpop.permute.xlu0 %830
        %834 = vset.pattern.permute.xlu0 0
        %835 = vperm.xlu0 %834, %v745
        %v836 = vpop.permute.xlu0 %835
        %839 = vset.pattern.permute.xlu0 0
        %840 = vperm.xlu0 %839, %v746
        %v841 = vpop.permute.xlu0 %840
        %844 = vset.pattern.permute.xlu0 0
        %845 = vperm.xlu0 %844, %v747
        %v846 = vpop.permute.xlu0 %845
        %849 = vset.pattern.permute.xlu0 0
        %850 = vperm.xlu0 %849, %v748
        %v851 = vpop.permute.xlu0 %850
        %854 = vset.pattern.permute.xlu0 0
        %855 = vperm.xlu0 %854, %v749
        %v856 = vpop.permute.xlu0 %855
        %859 = vset.pattern.permute.xlu0 0
        %860 = vperm.xlu0 %859, %v750
        %v861 = vpop.permute.xlu0 %860
        %864 = vset.pattern.permute.xlu0 0
        %865 = vperm.xlu0 %864, %v751
        %v866 = vpop.permute.xlu0 %865
        %869 = vset.pattern.permute.xlu0 0
        %870 = vperm.xlu0 %869, %v752
        %v871 = vpop.permute.xlu0 %870
        %874 = vset.pattern.permute.xlu0 0
        %875 = vperm.xlu0 %874, %v753
        %v876 = vpop.permute.xlu0 %875
        %879 = vset.pattern.permute.xlu0 0
        %880 = vperm.xlu0 %879, %v754
        %v881 = vpop.permute.xlu0 %880
        %884 = vset.pattern.permute.xlu0 0
        %885 = vperm.xlu0 %884, %v755
        %v886 = vpop.permute.xlu0 %885
        %889 = vset.pattern.permute.xlu0 0
        %890 = vperm.xlu0 %889, %v756
        %v891 = vpop.permute.xlu0 %890
        %894 = vset.pattern.permute.xlu0 0
        %895 = vperm.xlu0 %894, %v757
        %v896 = vpop.permute.xlu0 %895
        %899 = vset.pattern.permute.xlu0 0
        %900 = vperm.xlu0 %899, %v758
        %v901 = vpop.permute.xlu0 %900
        %904 = vset.pattern.permute.xlu0 0
        %905 = vperm.xlu0 %904, %v759
        %v906 = vpop.permute.xlu0 %905
        %909 = vset.pattern.permute.xlu0 0
        %910 = vperm.xlu0 %909, %v760
        %v911 = vpop.permute.xlu0 %910
        %914 = vset.pattern.permute.xlu0 0
        %915 = vperm.xlu0 %914, %v761
        %v916 = vpop.permute.xlu0 %915
        %919 = vset.pattern.permute.xlu0 0
        %920 = vperm.xlu0 %919, %v762
        %v921 = vpop.permute.xlu0 %920
        %v923 = vmul.f32 %v445, %v766
        %v924 = vmul.f32 %v448, %v771
        %v925 = vmul.f32 %v453, %v776
        %v926 = vmul.f32 %v456, %v781
        %v927 = vmul.f32 %v461, %v786
        %v928 = vmul.f32 %v464, %v791
        %v929 = vmul.f32 %v469, %v796
        %v930 = vmul.f32 %v472, %v801
        %v931 = vmul.f32 %v477, %v806
        %v932 = vmul.f32 %v480, %v811
        %v933 = vmul.f32 %v485, %v816
        %v934 = vmul.f32 %v488, %v821
        %v935 = vmul.f32 %v493, %v826
        %v936 = vmul.f32 %v496, %v831
        %v937 = vmul.f32 %v501, %v836
        %v938 = vmul.f32 %v504, %v841
        %v939 = vmul.f32 %v509, %v846
        %v940 = vmul.f32 %v512, %v851
        %v941 = vmul.f32 %v517, %v856
        %v942 = vmul.f32 %v520, %v861
        %v943 = vmul.f32 %v525, %v866
        %v944 = vmul.f32 %v528, %v871
        %v945 = vmul.f32 %v533, %v876
        %v946 = vmul.f32 %v536, %v881
        %v947 = vmul.f32 %v541, %v886
        %v948 = vmul.f32 %v544, %v891
        %v949 = vmul.f32 %v549, %v896
        %v950 = vmul.f32 %v552, %v901
        %v951 = vmul.f32 %v557, %v906
        %v952 = vmul.f32 %v560, %v911
        %v953 = vmul.f32 %v565, %v916
        %v954 = vmul.f32 %v568, %v921
        %v955 = vpack.c.bf16 %v924, %v923
        %v956 = vpack.c.bf16 %v926, %v925
        %v957 = vpack.c.bf16 %v928, %v927
        %v958 = vpack.c.bf16 %v930, %v929
        %v959 = vpack.c.bf16 %v932, %v931
        %v960 = vpack.c.bf16 %v934, %v933
        %v961 = vpack.c.bf16 %v936, %v935
        %v962 = vpack.c.bf16 %v938, %v937
        %v963 = vpack.c.bf16 %v940, %v939
        %v964 = vpack.c.bf16 %v942, %v941
        %v965 = vpack.c.bf16 %v944, %v943
        %v966 = vpack.c.bf16 %v946, %v945
        %v967 = vpack.c.bf16 %v948, %v947
        %v968 = vpack.c.bf16 %v950, %v949
        %v969 = vpack.c.bf16 %v952, %v951
        %v970 = vpack.c.bf16 %v954, %v953
        %v987 = vunpack.c.l.b16 %v955
        %v988 = vunpack.c.h.b16 %v955
        %v989 = vunpack.c.l.b16 %v956
        %v990 = vunpack.c.h.b16 %v956
        %v991 = vunpack.c.l.b16 %v957
        %v992 = vunpack.c.h.b16 %v957
        %v993 = vunpack.c.l.b16 %v958
        %v994 = vunpack.c.h.b16 %v958
        %v995 = vunpack.c.l.b16 %v959
        %v996 = vunpack.c.h.b16 %v959
        %v997 = vunpack.c.l.b16 %v960
        %v998 = vunpack.c.h.b16 %v960
        %v999 = vunpack.c.l.b16 %v961
        %v1000 = vunpack.c.h.b16 %v961
        %v1001 = vunpack.c.l.b16 %v962
        %v1002 = vunpack.c.h.b16 %v962
        %v1003 = vunpack.c.l.b16 %v963
        %v1004 = vunpack.c.h.b16 %v963
        %v1005 = vunpack.c.l.b16 %v964
        %v1006 = vunpack.c.h.b16 %v964
        %v1007 = vunpack.c.l.b16 %v965
        %v1008 = vunpack.c.h.b16 %v965
        %v1009 = vunpack.c.l.b16 %v966
        %v1010 = vunpack.c.h.b16 %v966
        %v1011 = vunpack.c.l.b16 %v967
        %v1012 = vunpack.c.h.b16 %v967
        %v1013 = vunpack.c.l.b16 %v968
        %v1014 = vunpack.c.h.b16 %v968
        %v1015 = vunpack.c.l.b16 %v969
        %v1016 = vunpack.c.h.b16 %v969
        %v1017 = vunpack.c.l.b16 %v970
        %v1018 = vunpack.c.h.b16 %v970
        %v1019 = vpack.c.b16 %v987, %v987
        %v1020 = vpack.c.b16 %v988, %v988
        %v1021 = vpack.c.b16 %v989, %v989
        %v1022 = vpack.c.b16 %v990, %v990
        %v1023 = vpack.c.b16 %v991, %v991
        %v1024 = vpack.c.b16 %v992, %v992
        %v1025 = vpack.c.b16 %v993, %v993
        %v1026 = vpack.c.b16 %v994, %v994
        %v1027 = vpack.c.b16 %v995, %v995
        %v1028 = vpack.c.b16 %v996, %v996
        %v1029 = vpack.c.b16 %v997, %v997
        %v1030 = vpack.c.b16 %v998, %v998
        %v1031 = vpack.c.b16 %v999, %v999
        %v1032 = vpack.c.b16 %v1000, %v1000
        %v1033 = vpack.c.b16 %v1001, %v1001
        %v1034 = vpack.c.b16 %v1002, %v1002
        %v1035 = vpack.c.b16 %v1003, %v1003
        %v1036 = vpack.c.b16 %v1004, %v1004
        %v1037 = vpack.c.b16 %v1005, %v1005
        %v1038 = vpack.c.b16 %v1006, %v1006
        %v1039 = vpack.c.b16 %v1007, %v1007
        %v1040 = vpack.c.b16 %v1008, %v1008
        %v1041 = vpack.c.b16 %v1009, %v1009
        %v1042 = vpack.c.b16 %v1010, %v1010
        %v1043 = vpack.c.b16 %v1011, %v1011
        %v1044 = vpack.c.b16 %v1012, %v1012
        %v1045 = vpack.c.b16 %v1013, %v1013
        %v1046 = vpack.c.b16 %v1014, %v1014
        %v1047 = vpack.c.b16 %v1015, %v1015
        %v1048 = vpack.c.b16 %v1016, %v1016
        %v1049 = vpack.c.b16 %v1017, %v1017
        %v1050 = vpack.c.b16 %v1018, %v1018
        %1083 = vst [vmem:[%s184] sm:$0xf] %v1019
        %1084 = vst [vmem:[%s184 + $0x4] sm:$0xf] %v1020
        %1085 = vst [vmem:[%s184 + $0x8] sm:$0xf] %v1021
        %1086 = vst [vmem:[%s184 + $0xc] sm:$0xf] %v1022
        %1087 = vst [vmem:[%s184 + $0x10] sm:$0xf] %v1023
        %1088 = vst [vmem:[%s184 + $0x14] sm:$0xf] %v1024
        %1089 = vst [vmem:[%s184 + $0x18] sm:$0xf] %v1025
        %1090 = vst [vmem:[%s184 + $0x1c] sm:$0xf] %v1026
        %1091 = vst [vmem:[%s184 + $0x20] sm:$0xf] %v1027
        %1092 = vst [vmem:[%s184 + $0x24] sm:$0xf] %v1028
        %1093 = vst [vmem:[%s184 + $0x28] sm:$0xf] %v1029
        %1094 = vst [vmem:[%s184 + $0x2c] sm:$0xf] %v1030
        %1095 = vst [vmem:[%s184 + $0x30] sm:$0xf] %v1031
        %1096 = vst [vmem:[%s184 + $0x34] sm:$0xf] %v1032
        %1097 = vst [vmem:[%s184 + $0x38] sm:$0xf] %v1033
        %1098 = vst [vmem:[%s184 + $0x3c] sm:$0xf] %v1034
        %1099 = vst [vmem:[%s184 + $0x40] sm:$0xf] %v1035
        %1100 = vst [vmem:[%s184 + $0x44] sm:$0xf] %v1036
        %1101 = vst [vmem:[%s184 + $0x48] sm:$0xf] %v1037
        %1102 = vst [vmem:[%s184 + $0x4c] sm:$0xf] %v1038
        %1103 = vst [vmem:[%s184 + $0x50] sm:$0xf] %v1039
        %1104 = vst [vmem:[%s184 + $0x54] sm:$0xf] %v1040
        %1105 = vst [vmem:[%s184 + $0x58] sm:$0xf] %v1041
        %1106 = vst [vmem:[%s184 + $0x5c] sm:$0xf] %v1042
        %1107 = vst [vmem:[%s184 + $0x60] sm:$0xf] %v1043
        %1108 = vst [vmem:[%s184 + $0x64] sm:$0xf] %v1044
        %1109 = vst [vmem:[%s184 + $0x68] sm:$0xf] %v1045
        %1110 = vst [vmem:[%s184 + $0x6c] sm:$0xf] %v1046
        %1111 = vst [vmem:[%s184 + $0x70] sm:$0xf] %v1047
        %1112 = vst [vmem:[%s184 + $0x74] sm:$0xf] %v1048
        %1113 = vst [vmem:[%s184 + $0x78] sm:$0xf] %v1049
        %1114 = vst [vmem:[%s184 + $0x7c] sm:$0xf] %v1050
        %s1115 = sand.u32 %s98, 1
        %s1116 = scalar_lea.sflag [#allocation3], %s1115
        %s1117 = sand.u32 %s98, 1
        %s1118 = smul.addr %s1117, 128
        %s1119 = scalar_lea.vmem [#allocation2], %s1118
        // Predicated region
        $region33: #{tpu_custom_call.1} parent=31 // pred_check
          %p1120 = pneg %p108
        $region34: #{tpu_custom_call.1} parent=31 // pred_check_branch
          %1122 = sbr.rel (%p1120) target = $region36
        $region35: #{tpu_custom_call.1} parent=31 // pred_region
          %s1123 = smul.u32 8, %s17
          %s1125 = ssub.s32 2048, 2048
          %1126 = vsyncadd %s1116, %s1125
          %s1127 = smul.addr %s1123, 4
          %s1128 = smul.addr %s1127, 64
          %s1129 = scalar_lea.hbm %s3, %s1128
          %s1130 = sshll.u32 %s1119, 4
          %s1131 = int_to_ptr.vmem [resolvable:$true] %s1130
          %1136 = dma.vmem_to_hbm [thread:$0]  %s1131, 2048, %s1129, %s1116, 64, 64, 4
        $region36: #{tpu_custom_call.1} parent=31 // pred_fallthru
          _
      $region32: #{tpu_custom_call.1} parent=5 // pred_fallthru
        _
      %p1137 = scmp.le.s32.totalorder 2, %s12
      // Predicated region
      $region37: #{tpu_custom_call.1} parent=5 // pred_check
        %p1138 = pneg %p1137
      $region38: #{tpu_custom_call.1} parent=5 // pred_check_branch
        %1140 = sbr.rel (%p1138) target = $region40
      $region39: #{tpu_custom_call.1} parent=5 // pred_region
        %s1141 = ssub.s32 %s12, 2
        // Predicated region
        $region41: #{tpu_custom_call.1} parent=39 // pred_check
          %p1142 = pneg %p114
        $region42: #{tpu_custom_call.1} parent=39 // pred_check_branch
          %1144 = sbr.rel (%p1142) target = $region44
        $region43: #{tpu_custom_call.1} parent=39 // pred_region
          %s1145 = sand.u32 %s99, 1
          %s1146 = scalar_lea.sflag [#allocation3], %s1145
          %s1147 = sand.u32 %s99, 1
          %s1148 = smul.addr %s1147, 128
          %s1149 = scalar_lea.vmem [#allocation2], %s1148
          %1150 = dma.done %s1146, 2048
        $region44: #{tpu_custom_call.1} parent=39 // pred_fallthru
          _
      $region40: #{tpu_custom_call.1} parent=5 // pred_fallthru
        _
    $region6: #{tpu_custom_call.1} parent=1 // loop_footer
      %s16 = sadd.s32 1, %s12
    $region7: #{tpu_custom_call.1} parent=1 // loop_footer_branch
      %11 = sbr.rel target = $region3
    $region8: #{tpu_custom_call.1} parent=1 // loop_exit
      _
    %1151 = vsyncpa [#allocation3], 1
    %s1152 = scalar_lea.sflag [#allocation3], 1
    %1153 = vsyncpa %s1152, 1

</llo_original>
